<compile_context>
chip_gen: v5e
topology: v5e:2x2
jax: 0.10.0
libtpu: 0.0.40
codegen_flags: <defaults>
</compile_context>

<pallas_src>
import functools

import jax
import jax.numpy as jnp
from jax import lax
from jax.experimental import pallas as pl
from jax.experimental.pallas import tpu as pltpu


LANE = 128             # every last (feature) dim is padded to a multiple of this
SUBLANE = 8            # sublane granularity for the batch dim
MAX_BATCH_TILE = 1024  # rows per batch tile (>=512 needed to reach HBM roofline)


def _round_up(x, m):
    return ((x + m - 1) // m) * m


def _choose_tile(batch):
    """Pick the batch tile: as large as possible (HBM roofline) but split into
    >= 2 grid blocks when the batch allows it so the "parallel" grid axis can
    shard across both TensorCores on v7x."""
    if batch <= 2 * SUBLANE:
        return _round_up(max(batch, 1), SUBLANE)
    half = _round_up(-(-batch // 2), SUBLANE)
    return min(half, MAX_BATCH_TILE)


def _elementwise_dtype(compute_dtype):
    """bf16 bias/tanh on v6e/v7x (bf16 VPU+EUP); f32 on v5e (no bf16 VPU/EUP)."""
    if compute_dtype == jnp.float32:
        return jnp.float32
    kind = jax.devices()[0].device_kind.lower()
    return jnp.float32 if "v5" in kind else compute_dtype


# ----------------------------------------------------------------------------
# Kernels
# ----------------------------------------------------------------------------
def ode_func_kernel(y_ref, w1_ref, b1_ref, w2_ref, b2_ref, o_ref, *, ew_dtype):
    """One forward eval: tanh(y @ W1 + b1) @ W2 + b2, f32 MXU accumulation."""
    h = jnp.dot(y_ref[...], w1_ref[...], preferred_element_type=jnp.float32)
    h = jnp.tanh(h.astype(ew_dtype) + b1_ref[...].astype(ew_dtype))
    out = jnp.dot(h.astype(w2_ref.dtype), w2_ref[...],
                  preferred_element_type=jnp.float32)
    o_ref[...] = (out + b2_ref[...].astype(jnp.float32)).astype(o_ref.dtype)


def ode_euler_kernel(y_ref, w1_ref, b1_ref, w2_ref, b2_ref, o_ref, *,
                     dt, n_steps, ew_dtype):
    """n_steps explicit-Euler steps of dy/dt = net(y), fused in one kernel.

    Weights/biases are read once; the f32 state never leaves VMEM until the
    final store.  Loop is unrolled (short, fixed trip count) and the bias
    broadcasts are hoisted (JAX does not CSE broadcast_in_dim)."""
    w1 = w1_ref[...]
    w2 = w2_ref[...]
    tile_m = y_ref.shape[0]
    b1 = jnp.broadcast_to(b1_ref[...].astype(ew_dtype), (tile_m, w1.shape[1]))
    b2 = jnp.broadcast_to(b2_ref[...].astype(jnp.float32), (tile_m, w2.shape[1]))

    def body(_, y):
        h = jnp.dot(y.astype(w1.dtype), w1, preferred_element_type=jnp.float32)
        h = jnp.tanh(h.astype(ew_dtype) + b1)
        f = jnp.dot(h.astype(w2.dtype), w2,
                    preferred_element_type=jnp.float32) + b2
        return y + dt * f

    y = lax.fori_loop(0, n_steps, body, y_ref[...].astype(jnp.float32),
                      unroll=True)
    o_ref[...] = y.astype(o_ref.dtype)


# ----------------------------------------------------------------------------
# Wrappers
# ----------------------------------------------------------------------------
def init_params(key, input_size, hidden_layer_size, output_size,
                dtype=jnp.float32):
    """Matches the PyTorch init: W ~ N(0, 0.1), b = 0.
    Weights stored as (in, out) == transpose of nn.Linear's (out, in)."""
    k1, k2 = jax.random.split(key)
    w1 = (0.1 * jax.random.normal(k1, (input_size, hidden_layer_size))).astype(dtype)
    b1 = jnp.zeros((hidden_layer_size,), dtype)
    w2 = (0.1 * jax.random.normal(k2, (hidden_layer_size, output_size))).astype(dtype)
    b2 = jnp.zeros((output_size,), dtype)
    return w1, b1, w2, b2


def pad_params(w1, b1, w2, b2, compute_dtype=jnp.bfloat16):
    """Zero-pad all feature dims to multiples of 128 (lane-dense), ONCE.
    Padding is mathematically exact (padded rows/cols contribute 0).
    Default compute dtype is bf16: halves DMA bytes and uses the native bf16
    MXU on v5e/v6e/v7x; accumulation stays f32 inside the kernels."""
    in_sz, hid = w1.shape
    out_sz = w2.shape[1]
    in_p, hid_p, out_p = (_round_up(d, LANE) for d in (in_sz, hid, out_sz))
    dt_ = compute_dtype or w1.dtype
    w1p = jnp.zeros((in_p, hid_p), dt_).at[:in_sz, :hid].set(w1.astype(dt_))
    b1p = jnp.zeros((1, hid_p), dt_).at[0, :hid].set(b1.astype(dt_))
    w2p = jnp.zeros((hid_p, out_p), dt_).at[:hid, :out_sz].set(w2.astype(dt_))
    b2p = jnp.zeros((1, out_p), dt_).at[0, :out_sz].set(b2.astype(dt_))
    return (w1p, b1p, w2p, b2p), (in_sz, hid, out_sz)


def _pad_batch(y, in_sz, in_p, dtype):
    batch = y.shape[0]
    tile_m = _choose_tile(batch)
    batch_p = _round_up(batch, SUBLANE)   # sublane granularity only (no dead tiles)
    y_p = jnp.zeros((batch_p, in_p), dtype).at[:batch, :in_sz].set(y.astype(dtype))
    return y_p, tile_m


def _call(kernel_fn, y_p, padded, tile_m, out_p, out_dtype):
    w1p, b1p, w2p, b2p = padded
    batch_p, in_p = y_p.shape
    hid_p = w1p.shape[1]
    grid = (pl.cdiv(batch_p, tile_m),)
    return pl.pallas_call(
        kernel_fn,
        out_shape=jax.ShapeDtypeStruct((batch_p, out_p), out_dtype),
        grid=grid,
        in_specs=[
            pl.BlockSpec((tile_m, in_p), lambda i: (i, 0)),   # y: tiled over batch
            pl.BlockSpec((in_p, hid_p), lambda i: (0, 0)),    # weights: VMEM-resident
            pl.BlockSpec((1, hid_p), lambda i: (0, 0)),
            pl.BlockSpec((hid_p, out_p), lambda i: (0, 0)),
            pl.BlockSpec((1, out_p), lambda i: (0, 0)),
        ],
        out_specs=pl.BlockSpec((tile_m, out_p), lambda i: (i, 0)),
        compiler_params=pltpu.CompilerParams(
            dimension_semantics=("parallel",)),  # batch blocks shard over TCs (v7x)
    )(y_p, w1p, b1p, w2p, b2p)


def ode_func_forward(t, y, padded_params, logical_dims):
    """Pallas equivalent of ODE_Func.forward(t, y) == net(y). t is ignored."""
    del t  # the ODE function ignores time, exactly as in the PyTorch module
    in_sz, _, out_sz = logical_dims
    w1p, _, w2p, _ = padded_params
    y_p, tile_m = _pad_batch(y, in_sz, w1p.shape[0], w1p.dtype)
    kernel = functools.partial(ode_func_kernel,
                               ew_dtype=_elementwise_dtype(w1p.dtype))
    out = _call(kernel, y_p, padded_params, tile_m, w2p.shape[1], y.dtype)
    return out[: y.shape[0], :out_sz]


def ode_func_forward_padded(t, y_p, padded_params, tile_m):
    """Forward on an already lane-dense padded state (batch_p, in_p).
    Use this (or ode_euler_fused) when an outer solver calls the forward many
    times: it avoids the per-call pad + output-slice HBM roundtrip."""
    del t
    w1p, _, w2p, _ = padded_params
    kernel = functools.partial(ode_func_kernel,
                               ew_dtype=_elementwise_dtype(w1p.dtype))
    return _call(kernel, y_p, padded_params, tile_m, w2p.shape[1], y_p.dtype)


def ode_euler_fused(y0, dt, n_steps, padded_params, logical_dims):
    """n_steps of y <- y + dt * net(y) fused into ONE pallas_call."""
    in_sz, _, out_sz = logical_dims
    assert in_sz == out_sz, "Euler fusion needs state dim == output dim"
    w1p, _, w2p, _ = padded_params
    assert w1p.shape[0] == w2p.shape[1]
    y_p, tile_m = _pad_batch(y0, in_sz, w1p.shape[0], jnp.float32)
    kernel = functools.partial(
        ode_euler_kernel, dt=float(dt), n_steps=int(n_steps),
        ew_dtype=_elementwise_dtype(w1p.dtype))
    out = _call(kernel, y_p, padded_params, tile_m, w2p.shape[1], y0.dtype)
    return out[: y0.shape[0], :out_sz]


if __name__ == "__main__":
    input_size, hidden_layer_size, output_size = 16, 32, 16
    batch = 8

    key = jax.random.PRNGKey(0)
    k_y, k_p = jax.random.split(key)

    y = jax.random.normal(k_y, (batch, input_size), dtype=jnp.float32)
    t = jnp.float32(0.0)  # ignored by forward, kept for API parity

    w1, b1, w2, b2 = init_params(k_p, input_size, hidden_layer_size, output_size)

    # references (pure JAX)
    ref = jnp.tanh(y @ w1 + b1) @ w2 + b2
    n_steps, dt = 8, 0.05
    y_ref = y
    for _ in range(n_steps):
        y_ref = y_ref + dt * (jnp.tanh(y_ref @ w1 + b1) @ w2 + b2)

    # --- f32 compute path: exact module semantics, tight tolerance ---
    padded32, dims = pad_params(w1, b1, w2, b2, compute_dtype=jnp.float32)
    out32 = jax.block_until_ready(ode_func_forward(t, y, padded32, dims))
    assert out32.shape == (batch, output_size)
    assert jnp.allclose(out32, ref, atol=1e-4, rtol=1e-4), \
        float(jnp.max(jnp.abs(out32 - ref)))
    yT32 = jax.block_until_ready(ode_euler_fused(y, dt, n_steps, padded32, dims))
    assert yT32.shape == (batch, input_size)
    assert jnp.allclose(yT32, y_ref, atol=1e-4, rtol=1e-4), \
        float(jnp.max(jnp.abs(yT32 - y_ref)))

    # --- bf16 compute path (default): halved MXU-operand DMA, looser tol ---
    padded16, dims16 = pad_params(w1, b1, w2, b2)   # bf16 default
    out16 = jax.block_until_ready(ode_func_forward(t, y, padded16, dims16))
    assert jnp.allclose(out16, ref, atol=5e-2, rtol=5e-2), \
        float(jnp.max(jnp.abs(out16 - ref)))
    yT16 = jax.block_until_ready(ode_euler_fused(y, dt, n_steps, padded16, dims16))
    assert jnp.allclose(yT16, y_ref, atol=5e-2, rtol=5e-2), \
        float(jnp.max(jnp.abs(yT16 - y_ref)))

    # --- padded-state forward variant (no per-call pad/slice roundtrip) ---
    y_p, tile_m = _pad_batch(y, dims16[0], padded16[0].shape[0],
                             padded16[0].dtype)
    outp = jax.block_until_ready(
        ode_func_forward_padded(t, y_p, padded16, tile_m))
    assert jnp.allclose(outp[:batch, :output_size], ref, atol=5e-2, rtol=5e-2)

    print("KERNEL_OK")
</pallas_src>

<mosaic_0001>
module attributes {stable_mosaic.version = 11 : i64} {
  func.func @ode_func_kernel(%arg0: i32, %arg1: memref<8x128xf32, #tpu.memory_space<vmem>>, %arg2: memref<128x128xf32, #tpu.memory_space<vmem>>, %arg3: memref<1x128xf32, #tpu.memory_space<vmem>>, %arg4: memref<128x128xf32, #tpu.memory_space<vmem>>, %arg5: memref<1x128xf32, #tpu.memory_space<vmem>>, %arg6: memref<8x128xf32, #tpu.memory_space<vmem>>) attributes {dimension_semantics = [#tpu.dimension_semantics<parallel>], iteration_bounds = array<i64: 1>, scalar_prefetch = 0 : i64, scratch_operands = 0 : i64, tpu.core_type = #tpu.core_type<tc>, window_params = [{transform_indices = @transform_0, window_bounds = array<i64: 8, 128>}, {pipeline_mode = #tpu.pipeline_mode<synchronous>, transform_indices = @transform_1, window_bounds = array<i64: 128, 128>}, {pipeline_mode = #tpu.pipeline_mode<synchronous>, transform_indices = @transform_2, window_bounds = array<i64: 1, 128>}, {pipeline_mode = #tpu.pipeline_mode<synchronous>, transform_indices = @transform_3, window_bounds = array<i64: 128, 128>}, {pipeline_mode = #tpu.pipeline_mode<synchronous>, transform_indices = @transform_4, window_bounds = array<i64: 1, 128>}, {transform_indices = @transform_5, window_bounds = array<i64: 8, 128>}]} {
    %c0 = arith.constant 0 : index
    %c0_0 = arith.constant 0 : index
    %0 = vector.load %arg1[%c0, %c0_0] : memref<8x128xf32, #tpu.memory_space<vmem>>, vector<8x128xf32>
    %c0_1 = arith.constant 0 : index
    %c0_2 = arith.constant 0 : index
    %1 = vector.load %arg2[%c0_1, %c0_2] : memref<128x128xf32, #tpu.memory_space<vmem>>, vector<128x128xf32>
    %cst = arith.constant dense<0.000000e+00> : vector<8x128xf32>
    %2 = tpu.matmul %0, %1, %cst {dimension_numbers = #tpu.dot_dimension_numbers<[1], [0], [0], [1], [0, 0, 1, 1], [], []>} : vector<8x128xf32>, vector<128x128xf32>, vector<8x128xf32> -> vector<8x128xf32>
    %c0_3 = arith.constant 0 : index
    %c0_4 = arith.constant 0 : index
    %3 = vector.load %arg3[%c0_3, %c0_4] : memref<1x128xf32, #tpu.memory_space<vmem>>, vector<1x128xf32>
    %4 = vector.broadcast %3 : vector<1x128xf32> to vector<8x128xf32>
    %5 = arith.addf %2, %4 : vector<8x128xf32>
    %6 = math.tanh %5 : vector<8x128xf32>
    %c0_5 = arith.constant 0 : index
    %c0_6 = arith.constant 0 : index
    %7 = vector.load %arg4[%c0_5, %c0_6] : memref<128x128xf32, #tpu.memory_space<vmem>>, vector<128x128xf32>
    %cst_7 = arith.constant dense<0.000000e+00> : vector<8x128xf32>
    %8 = tpu.matmul %6, %7, %cst_7 {dimension_numbers = #tpu.dot_dimension_numbers<[1], [0], [0], [1], [0, 0, 1, 1], [], []>} : vector<8x128xf32>, vector<128x128xf32>, vector<8x128xf32> -> vector<8x128xf32>
    %c0_8 = arith.constant 0 : index
    %c0_9 = arith.constant 0 : index
    %9 = vector.load %arg5[%c0_8, %c0_9] : memref<1x128xf32, #tpu.memory_space<vmem>>, vector<1x128xf32>
    %10 = vector.broadcast %9 : vector<1x128xf32> to vector<8x128xf32>
    %11 = arith.addf %8, %10 : vector<8x128xf32>
    %c0_10 = arith.constant 0 : index
    %c0_11 = arith.constant 0 : index
    %12 = vector.load %arg6[%c0_10, %c0_11] : memref<8x128xf32, #tpu.memory_space<vmem>>, vector<8x128xf32>
    tpu.vector_store %arg6[%c0_10, %c0_11], %11 {strides = array<i32>} : memref<8x128xf32, #tpu.memory_space<vmem>>, vector<8x128xf32>,
    return
  }
  func.func @transform_0(%arg0: i32) -> (i32, i32) {
    %c0_i32 = arith.constant 0 : i32
    %c0_i32_0 = arith.constant 0 : i32
    return %arg0, %c0_i32 : i32, i32
  }
  func.func @transform_1(%arg0: i32) -> (i32, i32) {
    %c0_i32 = arith.constant 0 : i32
    %c0_i32_0 = arith.constant 0 : i32
    %c0_i32_1 = arith.constant 0 : i32
    return %c0_i32, %c0_i32_0 : i32, i32
  }
  func.func @transform_2(%arg0: i32) -> (i32, i32) {
    %c0_i32 = arith.constant 0 : i32
    %c0_i32_0 = arith.constant 0 : i32
    %c0_i32_1 = arith.constant 0 : i32
    return %c0_i32, %c0_i32_0 : i32, i32
  }
  func.func @transform_3(%arg0: i32) -> (i32, i32) {
    %c0_i32 = arith.constant 0 : i32
    %c0_i32_0 = arith.constant 0 : i32
    %c0_i32_1 = arith.constant 0 : i32
    return %c0_i32, %c0_i32_0 : i32, i32
  }
  func.func @transform_4(%arg0: i32) -> (i32, i32) {
    %c0_i32 = arith.constant 0 : i32
    %c0_i32_0 = arith.constant 0 : i32
    %c0_i32_1 = arith.constant 0 : i32
    return %c0_i32, %c0_i32_0 : i32, i32
  }
  func.func @transform_5(%arg0: i32) -> (i32, i32) {
    %c0_i32 = arith.constant 0 : i32
    %c0_i32_0 = arith.constant 0 : i32
    return %arg0, %c0_i32 : i32, i32
  }
}

</mosaic_0001>

<llo_original>
// kernel: tpu_custom_call.1
$region0: #{tpu_custom_call.1}
  #allocation0 [shape = 'u32[]', space=smem, size = 0x4, offset = 0x4, fixed_abs, tag = 'smem constant byte address 0x4 - core index']
  #allocation1 [shape = 'u32[72,128]{1,0:T(1,128)}', space=vmem, size = 0x9000, scoped, tag = 'internal scratch']
  %s0 = inlined_call_operand.hbm [shape: f32[8,128], index: 0, kind: input, shape index: {}]
  %s1 = inlined_call_operand.hbm [shape: f32[128,128], index: 1, kind: input, shape index: {}]
  %s2 = inlined_call_operand.vmem [shape: f32[1,128], index: 2, kind: input, shape index: {}]
  %s3 = inlined_call_operand.hbm [shape: f32[128,128], index: 3, kind: input, shape index: {}]
  %s4 = inlined_call_operand.vmem [shape: f32[1,128], index: 4, kind: input, shape index: {}]
  %s5 = inlined_call_operand.hbm [shape: f32[8,128], index: 5, kind: output, shape index: {}]
  %s6 = sld [smem:[#allocation0]]
  $region42: #{tpu_custom_call.1} parent=0
    _
  %s8 = ssub.s32 1, %s6
  %s9 = scalar_select 0, %s8, %s6
  $region1: #{tpu_custom_call.1} parent=0
    #allocation2 [shape = 'u8[4096]{0}', space=vmem, size = 0x1000, scoped, tag = 'input window, operand 0, single buffered']
    #allocation3 [shape = 's32[1]{0}', space=sflag, size = 0x4, scoped, tag = 'scoped memory for tpu_custom_call.1']
    #allocation4 [shape = 's32[1]{0}', space=sflag, size = 0x4, scoped, tag = 'scoped memory for tpu_custom_call.1']
    #allocation5 [shape = 'u8[65536]{0}', space=vmem, size = 0x10000, scoped, tag = 'input window, operand 1, single buffered']
    #allocation6 [shape = 's32[1]{0}', space=sflag, size = 0x4, scoped, tag = 'scoped memory for tpu_custom_call.1']
    #allocation7 [shape = 'u8[65536]{0}', space=vmem, size = 0x10000, scoped, tag = 'input window, operand 3, single buffered']
    #allocation8 [shape = 'u8[4096]{0}', space=vmem, size = 0x1000, scoped, tag = 'output window, operand 0, single buffered']
    %10 = vsyncpa [#allocation3], 0
    %11 = vsyncpa [#allocation6], 0
    %12 = vsyncpa [#allocation4], 0
    // Predicated region
    $region2: #{tpu_custom_call.1} parent=1 // pred_check
      _
    $region3: #{tpu_custom_call.1} parent=1 // pred_check_branch
      %14 = sbr.rel (0) target = $region5
    $region4: #{tpu_custom_call.1} parent=1 // pred_region
      %16 = vsyncadd [#allocation3], 0
      %s18 = sshll.u32 %s0, 4
      %s19 = int_to_ptr.hbm [resolvable:$true] %s18
      %s20 = sshll.u32 [#allocation2], 4
      %s21 = int_to_ptr.vmem [resolvable:$true] %s20
      %23 = dma.hbm_to_vmem [thread:$0]  %s19, 128, %s21, [#allocation3]
    $region5: #{tpu_custom_call.1} parent=1 // pred_fallthru
      _
    // Predicated region
    $region6: #{tpu_custom_call.1} parent=1 // pred_check
      _
    $region7: #{tpu_custom_call.1} parent=1 // pred_check_branch
      %25 = sbr.rel (0) target = $region9
    $region8: #{tpu_custom_call.1} parent=1 // pred_region
      %27 = vsyncadd [#allocation6], 0
      %s28 = sshll.u32 %s1, 4
      %s29 = int_to_ptr.hbm [resolvable:$true] %s28
      %s30 = sshll.u32 [#allocation5], 4
      %s31 = int_to_ptr.vmem [resolvable:$true] %s30
      %36 = dma.hbm_to_vmem [thread:$0]  %s29, 2048, %s31, [#allocation6], 128, 128, 8
    $region9: #{tpu_custom_call.1} parent=1 // pred_fallthru
      _
    // Predicated region
    $region10: #{tpu_custom_call.1} parent=1 // pred_check
      _
    $region11: #{tpu_custom_call.1} parent=1 // pred_check_branch
      %38 = sbr.rel (0) target = $region13
    $region12: #{tpu_custom_call.1} parent=1 // pred_region
      _
    $region13: #{tpu_custom_call.1} parent=1 // pred_fallthru
      _
    // Predicated region
    $region14: #{tpu_custom_call.1} parent=1 // pred_check
      _
    $region15: #{tpu_custom_call.1} parent=1 // pred_check_branch
      %40 = sbr.rel (0) target = $region17
    $region16: #{tpu_custom_call.1} parent=1 // pred_region
      %42 = vsyncadd [#allocation6], 0
      %s43 = sshll.u32 %s3, 4
      %s44 = int_to_ptr.hbm [resolvable:$true] %s43
      %s45 = sshll.u32 [#allocation7], 4
      %s46 = int_to_ptr.vmem [resolvable:$true] %s45
      %51 = dma.hbm_to_vmem [thread:$0]  %s44, 2048, %s46, [#allocation6], 128, 128, 8
    $region17: #{tpu_custom_call.1} parent=1 // pred_fallthru
      _
    // Predicated region
    $region18: #{tpu_custom_call.1} parent=1 // pred_check
      _
    $region19: #{tpu_custom_call.1} parent=1 // pred_check_branch
      %53 = sbr.rel (0) target = $region21
    $region20: #{tpu_custom_call.1} parent=1 // pred_region
      _
    $region21: #{tpu_custom_call.1} parent=1 // pred_fallthru
      _
    // Predicated region
    $region22: #{tpu_custom_call.1} parent=1 // pred_check
      _
    $region23: #{tpu_custom_call.1} parent=1 // pred_check_branch
      %55 = sbr.rel (0) target = $region25
    $region24: #{tpu_custom_call.1} parent=1 // pred_region
      %57 = dma.done [#allocation3], 128
    $region25: #{tpu_custom_call.1} parent=1 // pred_fallthru
      _
    // Predicated region
    $region26: #{tpu_custom_call.1} parent=1 // pred_check
      _
    $region27: #{tpu_custom_call.1} parent=1 // pred_check_branch
      %59 = sbr.rel (0) target = $region29
    $region28: #{tpu_custom_call.1} parent=1 // pred_region
      %61 = dma.done [#allocation6], 2048
    $region29: #{tpu_custom_call.1} parent=1 // pred_fallthru
      _
    // Predicated region
    $region30: #{tpu_custom_call.1} parent=1 // pred_check
      _
    $region31: #{tpu_custom_call.1} parent=1 // pred_check_branch
      %63 = sbr.rel (0) target = $region33
    $region32: #{tpu_custom_call.1} parent=1 // pred_region
      %65 = dma.done [#allocation6], 2048
    $region33: #{tpu_custom_call.1} parent=1 // pred_fallthru
      _
    %v66 = vld [vmem:[#allocation2] sm:$0xff]
    %v67 = vld [vmem:[#allocation5] sm:$0xff]
    %v68 = vld [vmem:[#allocation5 + $0x8] sm:$0xff]
    %v69 = vld [vmem:[#allocation5 + $0x10] sm:$0xff]
    %v70 = vld [vmem:[#allocation5 + $0x18] sm:$0xff]
    %v71 = vld [vmem:[#allocation5 + $0x20] sm:$0xff]
    %v72 = vld [vmem:[#allocation5 + $0x28] sm:$0xff]
    %v73 = vld [vmem:[#allocation5 + $0x30] sm:$0xff]
    %v74 = vld [vmem:[#allocation5 + $0x38] sm:$0xff]
    %v75 = vld [vmem:[#allocation5 + $0x40] sm:$0xff]
    %v76 = vld [vmem:[#allocation5 + $0x48] sm:$0xff]
    %v77 = vld [vmem:[#allocation5 + $0x50] sm:$0xff]
    %v78 = vld [vmem:[#allocation5 + $0x58] sm:$0xff]
    %v79 = vld [vmem:[#allocation5 + $0x60] sm:$0xff]
    %v80 = vld [vmem:[#allocation5 + $0x68] sm:$0xff]
    %v81 = vld [vmem:[#allocation5 + $0x70] sm:$0xff]
    %v82 = vld [vmem:[#allocation5 + $0x78] sm:$0xff]
    %v83 = vld [vmem:[%s2] sm:$0x1]
    %v85 = vperm.slane %v83, 0
    %87 = vmatpush.msra.mxu0 %v82
    %88 = vmatpush.msra.mxu0 %v81
    %89 = vmatpush.msra.mxu0 %v80
    %90 = vmatpush.msra.mxu0 %v79
    %91 = vmatpush.msra.mxu0 %v78
    %92 = vmatpush.msra.mxu0 %v77
    %93 = vmatpush.msra.mxu0 %v76
    %94 = vmatpush.msra.mxu0 %v75
    %95 = vmatpush.msra.mxu0 %v74
    %96 = vmatpush.msra.mxu0 %v73
    %97 = vmatpush.msra.mxu0 %v72
    %98 = vmatpush.msra.mxu0 %v71
    %99 = vmatpush.msra.mxu0 %v70
    %100 = vmatpush.msra.mxu0 %v69
    %101 = vmatpush.msra.mxu0 %v68
    %102 = vmatpush.msra.mxu0 %v67
    %103 = vmatmul.f32.gmra.mxu0 %v66
    %v104 = vpop.f32.mrf.mxu0
    %v105 = vadd.f32 %v85, %v104
    %106 = vdwg.mxu0
    %v107 = vtanh.pop %v105
    %v108 = vld [vmem:[#allocation7] sm:$0xff]
    %v109 = vld [vmem:[#allocation7 + $0x8] sm:$0xff]
    %v110 = vld [vmem:[#allocation7 + $0x10] sm:$0xff]
    %v111 = vld [vmem:[#allocation7 + $0x18] sm:$0xff]
    %v112 = vld [vmem:[#allocation7 + $0x20] sm:$0xff]
    %v113 = vld [vmem:[#allocation7 + $0x28] sm:$0xff]
    %v114 = vld [vmem:[#allocation7 + $0x30] sm:$0xff]
    %v115 = vld [vmem:[#allocation7 + $0x38] sm:$0xff]
    %v116 = vld [vmem:[#allocation7 + $0x40] sm:$0xff]
    %v117 = vld [vmem:[#allocation7 + $0x48] sm:$0xff]
    %v118 = vld [vmem:[#allocation7 + $0x50] sm:$0xff]
    %v119 = vld [vmem:[#allocation7 + $0x58] sm:$0xff]
    %v120 = vld [vmem:[#allocation7 + $0x60] sm:$0xff]
    %v121 = vld [vmem:[#allocation7 + $0x68] sm:$0xff]
    %v122 = vld [vmem:[#allocation7 + $0x70] sm:$0xff]
    %v123 = vld [vmem:[#allocation7 + $0x78] sm:$0xff]
    %v124 = vld [vmem:[%s4] sm:$0x1]
    %v126 = vperm.slane %v124, 0
    %128 = vmatpush.msra.mxu0 %v123
    %129 = vmatpush.msra.mxu0 %v122
    %130 = vmatpush.msra.mxu0 %v121
    %131 = vmatpush.msra.mxu0 %v120
    %132 = vmatpush.msra.mxu0 %v119
    %133 = vmatpush.msra.mxu0 %v118
    %134 = vmatpush.msra.mxu0 %v117
    %135 = vmatpush.msra.mxu0 %v116
    %136 = vmatpush.msra.mxu0 %v115
    %137 = vmatpush.msra.mxu0 %v114
    %138 = vmatpush.msra.mxu0 %v113
    %139 = vmatpush.msra.mxu0 %v112
    %140 = vmatpush.msra.mxu0 %v111
    %141 = vmatpush.msra.mxu0 %v110
    %142 = vmatpush.msra.mxu0 %v109
    %143 = vmatpush.msra.mxu0 %v108
    %144 = vmatmul.f32.gmra.mxu0 %v107
    %v145 = vpop.f32.mrf.mxu0
    %v146 = vadd.f32 %v126, %v145
    %147 = vdwg.mxu0
    %148 = vst [vmem:[#allocation8] sm:$0xff] %v146
    // Predicated region
    $region34: #{tpu_custom_call.1} parent=1 // pred_check
      _
    $region35: #{tpu_custom_call.1} parent=1 // pred_check_branch
      %150 = sbr.rel (0) target = $region37
    $region36: #{tpu_custom_call.1} parent=1 // pred_region
      %152 = vsyncadd [#allocation4], 0
      %s154 = sshll.u32 [#allocation8], 4
      %s155 = int_to_ptr.vmem [resolvable:$true] %s154
      %s156 = sshll.u32 %s5, 4
      %s157 = int_to_ptr.hbm [resolvable:$true] %s156
      %159 = dma.vmem_to_hbm [thread:$0]  %s155, 128, %s157, [#allocation4]
    $region37: #{tpu_custom_call.1} parent=1 // pred_fallthru
      _
    // Predicated region
    $region38: #{tpu_custom_call.1} parent=1 // pred_check
      _
    $region39: #{tpu_custom_call.1} parent=1 // pred_check_branch
      %161 = sbr.rel (0) target = $region41
    $region40: #{tpu_custom_call.1} parent=1 // pred_region
      %163 = dma.done [#allocation4], 128
    $region41: #{tpu_custom_call.1} parent=1 // pred_fallthru
      _
    %164 = vsyncpa [#allocation3], 1
    %165 = vsyncpa [#allocation6], 1
    %166 = vsyncpa [#allocation4], 1

</llo_original>
